<compile_context>
chip_gen: v5e
topology: v5e:2x2
jax: 0.10.0
libtpu: 0.0.40
codegen_flags: <defaults>
</compile_context>

<pallas_src>
import jax
import jax.numpy as jnp
from jax.experimental import pallas as pl
from jax.experimental.pallas import tpu as pltpu

# Beale constants, baked into the kernel body as literals.
_Y1, _Y2, _Y3 = 1.5, 2.25, 2.625


def func2_fused_kernel(x_ref, f_ref, g_ref):
    """Scalar SMEM kernel: f_ref[0] = f(x); g_ref[:] = grad f(x)."""
    w = x_ref[0]
    z = x_ref[1]

    # Reused powers of z.
    z2 = z * z
    z3 = z2 * z

    # u_i = 1 - z^i  (same expression/rounding order as the PyTorch module)
    u1 = 1.0 - z
    u2 = 1.0 - z2
    u3 = 1.0 - z3

    # t_i = y_i - w * u_i
    t1 = _Y1 - w * u1
    t2 = _Y2 - w * u2
    t3 = _Y3 - w * u3

    # Forward value.
    f_ref[0] = t1 * t1 + t2 * t2 + t3 * t3

    # Analytic gradient (free: scalar-ALU slot has huge slack).
    #   df/dw = -2 * sum_i t_i * u_i
    #   df/dz =  2 * w * (t1 + 2*t2*z + 3*t3*z^2)
    g_ref[0] = -2.0 * (t1 * u1 + t2 * u2 + t3 * u3)
    g_ref[1] = 2.0 * w * (t1 + 2.0 * t2 * z + 3.0 * t3 * z2)


def _func2_pallas(x):
    """Single fused launch -> (f: f32[1], grad: f32[2])."""
    if x.dtype != jnp.float32:
        x = x.astype(jnp.float32)
    f, g = pl.pallas_call(
        func2_fused_kernel,
        out_shape=(
            jax.ShapeDtypeStruct((1,), jnp.float32),
            jax.ShapeDtypeStruct((2,), jnp.float32),
        ),
        in_specs=[pl.BlockSpec(memory_space=pltpu.SMEM)],
        out_specs=(
            pl.BlockSpec(memory_space=pltpu.SMEM),
            pl.BlockSpec(memory_space=pltpu.SMEM),
        ),
        cost_estimate=pl.CostEstimate(
            flops=30, transcendentals=0, bytes_accessed=20
        ),
    )(x)
    return f, g


@jax.custom_vjp
def func2(x):
    """x: f32[2] -> scalar f32 (0-d array). Differentiable (fused VJP)."""
    f, _ = _func2_pallas(x)
    return f.reshape(())


def _func2_vjp_fwd(x):
    f, g = _func2_pallas(x)
    return f.reshape(()), g          # gradient is the residual; no 2nd launch


def _func2_vjp_bwd(g, ct):
    return (ct * g,)


func2.defvjp(_func2_vjp_fwd, _func2_vjp_bwd)


def func2_ref(x):
    """Pure-JAX reference matching the PyTorch forward (preferred hot path)."""
    y = jnp.array([_Y1, _Y2, _Y3], dtype=jnp.float32)
    w, z = x[0], x[1]
    z_pow = jnp.stack([1.0 - z, 1.0 - z ** 2, 1.0 - z ** 3])
    term = y - w * z_pow
    return jnp.sum(term ** 2)


if __name__ == "__main__":
    key = jax.random.PRNGKey(0)
    x = jax.random.normal(key, (2,), dtype=jnp.float32)

    # Forward.
    f = func2(x)
    jax.block_until_ready(f)
    f_ref = func2_ref(x)
    assert jnp.allclose(f, f_ref, rtol=1e-5, atol=1e-5), (f, f_ref)

    # Gradient (fused into the same launch via custom_vjp).
    g = jax.grad(func2)(x)
    jax.block_until_ready(g)
    g_ref = jax.grad(func2_ref)(x)
    assert jnp.allclose(g, g_ref, rtol=1e-5, atol=1e-5), (g, g_ref)

    print("KERNEL_OK")
</pallas_src>

<mosaic_0001>
module attributes {stable_mosaic.version = 11 : i64} {
  func.func @func2_fused_kernel(%arg0: memref<2xf32, #tpu.memory_space<smem>>, %arg1: memref<1xf32, #tpu.memory_space<smem>>, %arg2: memref<2xf32, #tpu.memory_space<smem>>) attributes {dimension_semantics = [], scalar_prefetch = 0 : i64, scratch_operands = 0 : i64, tpu.core_type = #tpu.core_type<tc>} {
    %c0 = arith.constant 0 : index
    %0 = memref.load %arg0[%c0] : memref<2xf32, #tpu.memory_space<smem>>
    %c1 = arith.constant 1 : index
    %1 = memref.load %arg0[%c1] : memref<2xf32, #tpu.memory_space<smem>>
    %2 = arith.mulf %1, %1 : f32
    %3 = arith.mulf %2, %1 : f32
    %cst = arith.constant 1.000000e+00 : f32
    %4 = arith.subf %cst, %1 : f32
    %cst_0 = arith.constant 1.000000e+00 : f32
    %5 = arith.subf %cst_0, %2 : f32
    %cst_1 = arith.constant 1.000000e+00 : f32
    %6 = arith.subf %cst_1, %3 : f32
    %7 = arith.mulf %0, %4 : f32
    %cst_2 = arith.constant 1.500000e+00 : f32
    %8 = arith.subf %cst_2, %7 : f32
    %9 = arith.mulf %0, %5 : f32
    %cst_3 = arith.constant 2.250000e+00 : f32
    %10 = arith.subf %cst_3, %9 : f32
    %11 = arith.mulf %0, %6 : f32
    %cst_4 = arith.constant 2.625000e+00 : f32
    %12 = arith.subf %cst_4, %11 : f32
    %13 = arith.mulf %8, %8 : f32
    %14 = arith.mulf %10, %10 : f32
    %15 = arith.addf %13, %14 : f32
    %16 = arith.mulf %12, %12 : f32
    %17 = arith.addf %15, %16 : f32
    %c0_5 = arith.constant 0 : index
    %18 = memref.load %arg1[%c0_5] : memref<1xf32, #tpu.memory_space<smem>>
    memref.store %17, %arg1[%c0_5] : memref<1xf32, #tpu.memory_space<smem>>
    %19 = arith.mulf %8, %4 : f32
    %20 = arith.mulf %10, %5 : f32
    %21 = arith.addf %19, %20 : f32
    %22 = arith.mulf %12, %6 : f32
    %23 = arith.addf %21, %22 : f32
    %cst_6 = arith.constant -2.000000e+00 : f32
    %24 = arith.mulf %cst_6, %23 : f32
    %c0_7 = arith.constant 0 : index
    %25 = memref.load %arg2[%c0_7] : memref<2xf32, #tpu.memory_space<smem>>
    memref.store %24, %arg2[%c0_7] : memref<2xf32, #tpu.memory_space<smem>>
    %cst_8 = arith.constant 2.000000e+00 : f32
    %26 = arith.mulf %cst_8, %0 : f32
    %cst_9 = arith.constant 2.000000e+00 : f32
    %27 = arith.mulf %cst_9, %10 : f32
    %28 = arith.mulf %27, %1 : f32
    %29 = arith.addf %8, %28 : f32
    %cst_10 = arith.constant 3.000000e+00 : f32
    %30 = arith.mulf %cst_10, %12 : f32
    %31 = arith.mulf %30, %2 : f32
    %32 = arith.addf %29, %31 : f32
    %33 = arith.mulf %26, %32 : f32
    %c1_11 = arith.constant 1 : index
    %34 = memref.load %arg2[%c1_11] : memref<2xf32, #tpu.memory_space<smem>>
    memref.store %33, %arg2[%c1_11] : memref<2xf32, #tpu.memory_space<smem>>
    return
  }
}

</mosaic_0001>

<llo_original>
// kernel: tpu_custom_call.1
$region0: #{tpu_custom_call.1}
  #allocation0 [shape = 'u32[]', space=smem, size = 0x4, offset = 0x4, fixed_abs, tag = 'smem constant byte address 0x4 - core index']
  #allocation1 [shape = 'u32[72,128]{1,0:T(1,128)}', space=vmem, size = 0x9000, scoped, tag = 'internal scratch']
  %s0 = inlined_call_operand.hbm [shape: f32[2], index: 0, kind: input, shape index: {}]
  %s1 = inlined_call_operand.hbm [shape: f32[1], index: 1, kind: output, shape index: {0}]
  %s2 = inlined_call_operand.hbm [shape: f32[2], index: 2, kind: output, shape index: {1}]
  %3 = xla_tuple %s1, %s2
  %s4 = sld [smem:[#allocation0]]
  $region26: #{tpu_custom_call.1} parent=0
    _
  %s6 = ssub.s32 1, %s4
  %s7 = scalar_select 0, %s6, %s4
  $region1: #{tpu_custom_call.1} parent=0
    #allocation2 [shape = 'u8[512]{0}', space=smem, size = 0x200, scoped, tag = 'input window, operand 0, single buffered']
    #allocation3 [shape = 's32[1]{0}', space=sflag, size = 0x4, scoped, tag = 'scoped memory for tpu_custom_call.1']
    #allocation4 [shape = 's32[1]{0}', space=sflag, size = 0x4, scoped, tag = 'scoped memory for tpu_custom_call.1']
    #allocation5 [shape = 'u8[512]{0}', space=smem, size = 0x200, scoped, tag = 'output window, operand 0, single buffered']
    #allocation6 [shape = 'u8[512]{0}', space=smem, size = 0x200, scoped, tag = 'output window, operand 1, single buffered']
    #allocation7 [shape = 's32[1]{0}', space=sflag, size = 0x4, scoped, tag = 'scoped memory for tpu_custom_call.1']
    %8 = vsyncpa [#allocation3], 0
    %9 = vsyncpa [#allocation4], 0
    %10 = vsyncpa [#allocation7], 0
    // Predicated region
    $region2: #{tpu_custom_call.1} parent=1 // pred_check
      _
    $region3: #{tpu_custom_call.1} parent=1 // pred_check_branch
      %12 = sbr.rel (0) target = $region5
    $region4: #{tpu_custom_call.1} parent=1 // pred_region
      %14 = vsyncadd [#allocation3], 0
      %s16 = sshll.u32 %s0, 4
      %s17 = int_to_ptr.hbm [resolvable:$true] %s16
      %19 = dma.hbm_to_smem %s17, 16, [#allocation2], [#allocation3]
    $region5: #{tpu_custom_call.1} parent=1 // pred_fallthru
      _
    // Predicated region
    $region6: #{tpu_custom_call.1} parent=1 // pred_check
      _
    $region7: #{tpu_custom_call.1} parent=1 // pred_check_branch
      %21 = sbr.rel (0) target = $region9
    $region8: #{tpu_custom_call.1} parent=1 // pred_region
      %23 = dma.done [#allocation3], 16
    $region9: #{tpu_custom_call.1} parent=1 // pred_fallthru
      _
    %24 = sfence
    %s25 = sld [smem:[#allocation2]]
    %s26 = sld [smem:[#allocation2 + $0x1]]
    %s27 = smul.f32 %s26, %s26
    %s28 = smul.f32 %s27, %s26
    %s29 = ssub.f32 1.0, %s26
    %s30 = ssub.f32 1.0, %s27
    %s31 = ssub.f32 1.0, %s28
    %s32 = smul.f32 %s25, %s29
    %s33 = ssub.f32 1.5, %s32
    %s34 = smul.f32 %s25, %s30
    %s35 = ssub.f32 2.25, %s34
    %s36 = smul.f32 %s25, %s31
    %s37 = ssub.f32 2.625, %s36
    %s38 = smul.f32 %s33, %s33
    %s39 = smul.f32 %s35, %s35
    %s40 = sadd.f32 %s38, %s39
    %s41 = smul.f32 %s37, %s37
    %s42 = sadd.f32 %s40, %s41
    %s43 = scalar_lea.smem [#allocation5], 0
    %44 = sst [smem:[%s43]] %s42
    %s45 = smul.f32 %s33, %s29
    %s46 = smul.f32 %s35, %s30
    %s47 = sadd.f32 %s45, %s46
    %s48 = smul.f32 %s37, %s31
    %s49 = sadd.f32 %s47, %s48
    %s50 = smul.f32 %s49, -2.0
    %s51 = scalar_lea.smem [#allocation6], 0
    %52 = sst [smem:[%s51]] %s50
    %s53 = smul.f32 %s25, 2.0
    %s54 = smul.f32 %s35, 2.0
    %s55 = smul.f32 %s54, %s26
    %s56 = sadd.f32 %s33, %s55
    %s57 = smul.f32 %s37, 3.0
    %s58 = smul.f32 %s57, %s27
    %s59 = sadd.f32 %s56, %s58
    %s60 = smul.f32 %s53, %s59
    %s61 = scalar_lea.smem [#allocation6], 1
    %62 = sst [smem:[%s61]] %s60
    // Predicated region
    $region10: #{tpu_custom_call.1} parent=1 // pred_check
      _
    $region11: #{tpu_custom_call.1} parent=1 // pred_check_branch
      %64 = sbr.rel (0) target = $region13
    $region12: #{tpu_custom_call.1} parent=1 // pred_region
      %66 = vsyncadd [#allocation4], 0
      %s68 = sshll.u32 %s1, 4
      %s69 = int_to_ptr.hbm [resolvable:$true] %s68
      %71 = dma.smem_to_hbm [#allocation5], 16, %s69, [#allocation4]
    $region13: #{tpu_custom_call.1} parent=1 // pred_fallthru
      _
    // Predicated region
    $region14: #{tpu_custom_call.1} parent=1 // pred_check
      _
    $region15: #{tpu_custom_call.1} parent=1 // pred_check_branch
      %73 = sbr.rel (0) target = $region17
    $region16: #{tpu_custom_call.1} parent=1 // pred_region
      %75 = vsyncadd [#allocation7], 0
      %s77 = sshll.u32 %s2, 4
      %s78 = int_to_ptr.hbm [resolvable:$true] %s77
      %80 = dma.smem_to_hbm [#allocation6], 16, %s78, [#allocation7]
    $region17: #{tpu_custom_call.1} parent=1 // pred_fallthru
      _
    // Predicated region
    $region18: #{tpu_custom_call.1} parent=1 // pred_check
      _
    $region19: #{tpu_custom_call.1} parent=1 // pred_check_branch
      %82 = sbr.rel (0) target = $region21
    $region20: #{tpu_custom_call.1} parent=1 // pred_region
      %84 = dma.done [#allocation4], 16
    $region21: #{tpu_custom_call.1} parent=1 // pred_fallthru
      _
    // Predicated region
    $region22: #{tpu_custom_call.1} parent=1 // pred_check
      _
    $region23: #{tpu_custom_call.1} parent=1 // pred_check_branch
      %86 = sbr.rel (0) target = $region25
    $region24: #{tpu_custom_call.1} parent=1 // pred_region
      %88 = dma.done [#allocation7], 16
    $region25: #{tpu_custom_call.1} parent=1 // pred_fallthru
      _
    %89 = sfence
    %90 = vsyncpa [#allocation3], 1
    %91 = vsyncpa [#allocation4], 1
    %92 = vsyncpa [#allocation7], 1

</llo_original>
